<compile_context>
chip_gen: v5e
topology: v5e:2x2
jax: 0.10.0
libtpu: 0.0.40
codegen_flags: <defaults>
</compile_context>

<pallas_src>
import numpy as np
import jax
import jax.numpy as jnp
from jax import lax
from jax.experimental import pallas as pl
from jax.experimental.pallas import tpu as pltpu

# Module-level constants from the original script's scope.
ni = 16
weight_stagger = 4
k = 4  # conv kernel size == spatial extent of the input

# Padded class axis: lane-dense output row (unmasked vst), sliced in wrapper.
N_PAD = 128


def _dense_head_kernel(x_ref, wt_ref, o_ref):
    """out[b, n] = sum_k x[b, k] * wt[k, n]   (padded classes stay zero).

    x_ref : (B, n_inputs)   lane-dense activation rows (n_inputs % 8 == 0)
    wt_ref: (n_inputs, 128) padded W^T (inputs on sublanes, classes on lanes)
    o_ref : (B, 128)        lane-dense class scores
    """
    # Single MXU pass; HIGHEST precision keeps the f32 contraction exact.
    o_ref[...] = jnp.dot(
        x_ref[...], wt_ref[...],
        preferred_element_type=jnp.float32,
        precision=lax.Precision.HIGHEST)


def prepare_dense_weight(dense_weight):
    """One-time setup: transposed + class-padded weight constant.

    dense_weight: (n_classes, n_inputs) float32 (== nn.Linear weight)
    returns:      (n_inputs, N_PAD) float32 with wt[k, n] = dense_weight[n, k]
    """
    n_classes, n_inputs = dense_weight.shape
    assert n_inputs % 8 == 0, "contraction dim must be sublane-aligned"
    assert n_classes <= N_PAD
    wt = jnp.zeros((n_inputs, N_PAD), jnp.float32)
    return wt.at[:, :n_classes].set(jnp.asarray(dense_weight, jnp.float32).T)


def dense_to_conv_forward(x_flat, wt_pad, n_classes):
    """Pallas forward of DensetoConv.

    x_flat : (B, n_inputs) float32   flattened NCHW activation(s)
    wt_pad : (n_inputs, N_PAD) f32   from prepare_dense_weight (model constant)
    returns: (B, n_classes) float32  (bias is zero in the module)
    """
    B, n_inputs = x_flat.shape
    flops = 2 * B * n_inputs * N_PAD
    bytes_accessed = 4 * (B * n_inputs + n_inputs * N_PAD + B * N_PAD)

    out_pad = pl.pallas_call(
        _dense_head_kernel,
        out_shape=jax.ShapeDtypeStruct((B, N_PAD), jnp.float32),
        # Grid-less call: single invocation, whole arrays resident in VMEM,
        # no 1-step software pipeline / double-buffered DMA setup.
        in_specs=[
            pl.BlockSpec(memory_space=pltpu.MemorySpace.VMEM),
            pl.BlockSpec(memory_space=pltpu.MemorySpace.VMEM),
        ],
        out_specs=pl.BlockSpec(memory_space=pltpu.MemorySpace.VMEM),
        cost_estimate=pl.CostEstimate(
            flops=flops, transcendentals=0, bytes_accessed=bytes_accessed),
    )(x_flat.astype(jnp.float32), wt_pad)
    return out_pad[:, :n_classes]


def reference_forward(x_flat, dense_weight, rounded_channels, C):
    """Pure-JAX reference replicating both the dense and conv paths.

    Test-only (contains a host-side assert, like the module's torch.equal);
    keep it out of any jitted / benchmarked path.
    """
    n_classes, _ = dense_weight.shape
    dense_out = x_flat @ dense_weight.T  # bias is zeros

    # Conv path: zero-pad channels, full-extent kxk conv == same dot product.
    w_conv = dense_weight.reshape(n_classes, C, k, k)
    w_conv_pad = jnp.zeros((n_classes, rounded_channels, k, k), jnp.float32)
    w_conv_pad = w_conv_pad.at[:, :C].set(w_conv)
    x_conv = jnp.zeros((x_flat.shape[0], rounded_channels, k, k), jnp.float32)
    x_conv = x_conv.at[:, :C].set(x_flat.reshape(-1, C, k, k))
    conv_out = jnp.einsum("bchw,ochw->bo", x_conv, w_conv_pad)
    np.testing.assert_allclose(
        np.asarray(dense_out), np.asarray(conv_out), rtol=1e-5, atol=1e-5)
    return dense_out


if __name__ == "__main__":
    # Small shapes consistent with the module: input (1, C, k, k), k = 4.
    C = 4
    n_classes = 8
    input_shape = (1, C, k, k)
    rounded_channels = int(
        np.ceil(input_shape[1] / (ni // weight_stagger)) * ni // weight_stagger)
    n_inputs = C * k * k  # 64

    key = jax.random.PRNGKey(0)
    kx, kw = jax.random.split(key)
    # Deterministic synthetic parameters (weights of shape (n_classes, C, k, k)).
    weights = jax.random.normal(kw, (n_classes, C, k, k), jnp.float32)
    dense_weight = weights.reshape(n_classes, -1)        # (n_classes, n_inputs)
    # Activation: flattened NCHW input.
    x = jax.random.normal(kx, input_shape, jnp.float32).reshape(1, n_inputs)

    # One-time constant (per model), outside the per-call hot path.
    wt_pad = jax.block_until_ready(prepare_dense_weight(dense_weight))

    fwd = jax.jit(lambda xf: dense_to_conv_forward(xf, wt_pad, n_classes))
    out = jax.block_until_ready(fwd(x))

    ref = reference_forward(x, dense_weight, rounded_channels, C)
    np.testing.assert_allclose(np.asarray(out), np.asarray(ref),
                               rtol=1e-5, atol=1e-5)
    assert out.shape == (1, n_classes)
    print("KERNEL_OK")
</pallas_src>

<mosaic_0001>
module attributes {stable_mosaic.version = 11 : i64} {
  func.func @_dense_head_kernel(%arg0: memref<1x64xf32, #tpu.memory_space<vmem>>, %arg1: memref<64x128xf32, #tpu.memory_space<vmem>>, %arg2: memref<1x128xf32, #tpu.memory_space<vmem>>) attributes {dimension_semantics = [], scalar_prefetch = 0 : i64, scratch_operands = 0 : i64, tpu.core_type = #tpu.core_type<tc>} {
    %c0 = arith.constant 0 : index
    %c0_0 = arith.constant 0 : index
    %0 = vector.load %arg0[%c0, %c0_0] : memref<1x64xf32, #tpu.memory_space<vmem>>, vector<1x64xf32>
    %c0_1 = arith.constant 0 : index
    %c0_2 = arith.constant 0 : index
    %1 = vector.load %arg1[%c0_1, %c0_2] : memref<64x128xf32, #tpu.memory_space<vmem>>, vector<64x128xf32>
    %cst = arith.constant dense<0.000000e+00> : vector<1x128xf32>
    %2 = tpu.matmul %0, %1, %cst {dimension_numbers = #tpu.dot_dimension_numbers<[1], [0], [0], [1], [0, 0, 1, 1], [], []>, precision = #tpu.contract_precision<fp32>} : vector<1x64xf32>, vector<64x128xf32>, vector<1x128xf32> -> vector<1x128xf32>
    %c0_3 = arith.constant 0 : index
    %c0_4 = arith.constant 0 : index
    %3 = vector.load %arg2[%c0_3, %c0_4] : memref<1x128xf32, #tpu.memory_space<vmem>>, vector<1x128xf32>
    tpu.vector_store %arg2[%c0_3, %c0_4], %2 {strides = array<i32>} : memref<1x128xf32, #tpu.memory_space<vmem>>, vector<1x128xf32>,
    return
  }
}

</mosaic_0001>

<llo_original>
// kernel: _lambda_.1
$region0: #{_lambda_.1}
  #allocation0 [shape = 'u32[]', space=smem, size = 0x4, offset = 0x4, fixed_abs, tag = 'smem constant byte address 0x4 - core index']
  #allocation1 [shape = 'u32[72,128]{1,0:T(1,128)}', space=vmem, size = 0x9000, scoped, tag = 'internal scratch']
  %s0 = inlined_call_operand.hbm [shape: f32[1,64], index: 0, kind: input, shape index: {}]
  %s1 = inlined_call_operand.hbm [shape: f32[64,128], index: 1, kind: input, shape index: {}]
  %s2 = inlined_call_operand.hbm [shape: f32[1,128], index: 2, kind: output, shape index: {}]
  %s3 = sld [smem:[#allocation0]]
  $region26: #{_lambda_.1} parent=0
    _
  %s5 = ssub.s32 1, %s3
  %s6 = scalar_select 0, %s5, %s3
  $region1: #{_lambda_.1} parent=0
    #allocation2 [shape = 'u8[512]{0}', space=vmem, size = 0x400, scoped, tag = 'input window, operand 0, single buffered']
    #allocation3 [shape = 's32[1]{0}', space=sflag, size = 0x4, scoped, tag = 'scoped memory for _lambda_.1']
    #allocation4 [shape = 's32[1]{0}', space=sflag, size = 0x4, scoped, tag = 'scoped memory for _lambda_.1']
    #allocation5 [shape = 'u8[32768]{0}', space=vmem, size = 0x8000, scoped, tag = 'input window, operand 1, single buffered']
    #allocation6 [shape = 's32[1]{0}', space=sflag, size = 0x4, scoped, tag = 'scoped memory for _lambda_.1']
    #allocation7 [shape = 'u8[512]{0}', space=vmem, size = 0x400, scoped, tag = 'output window, operand 0, single buffered']
    %7 = vsyncpa [#allocation3], 0
    %8 = vsyncpa [#allocation6], 0
    %9 = vsyncpa [#allocation4], 0
    // Predicated region
    $region2: #{_lambda_.1} parent=1 // pred_check
      _
    $region3: #{_lambda_.1} parent=1 // pred_check_branch
      %11 = sbr.rel (0) target = $region5
    $region4: #{_lambda_.1} parent=1 // pred_region
      %13 = vsyncadd [#allocation3], 0
      %s15 = sshll.u32 %s0, 4
      %s16 = int_to_ptr.hbm [resolvable:$true] %s15
      %s17 = sshll.u32 [#allocation2], 4
      %s18 = int_to_ptr.vmem [resolvable:$true] %s17
      %20 = dma.hbm_to_vmem [thread:$0]  %s16, 16, %s18, [#allocation3]
    $region5: #{_lambda_.1} parent=1 // pred_fallthru
      _
    // Predicated region
    $region6: #{_lambda_.1} parent=1 // pred_check
      _
    $region7: #{_lambda_.1} parent=1 // pred_check_branch
      %22 = sbr.rel (0) target = $region9
    $region8: #{_lambda_.1} parent=1 // pred_region
      %24 = vsyncadd [#allocation6], 0
      %s25 = sshll.u32 %s1, 4
      %s26 = int_to_ptr.hbm [resolvable:$true] %s25
      %s27 = sshll.u32 [#allocation5], 4
      %s28 = int_to_ptr.vmem [resolvable:$true] %s27
      %33 = dma.hbm_to_vmem [thread:$0]  %s26, 1024, %s28, [#allocation6], 128, 128, 8
    $region9: #{_lambda_.1} parent=1 // pred_fallthru
      _
    // Predicated region
    $region10: #{_lambda_.1} parent=1 // pred_check
      _
    $region11: #{_lambda_.1} parent=1 // pred_check_branch
      %35 = sbr.rel (0) target = $region13
    $region12: #{_lambda_.1} parent=1 // pred_region
      %37 = dma.done [#allocation3], 16
    $region13: #{_lambda_.1} parent=1 // pred_fallthru
      _
    // Predicated region
    $region14: #{_lambda_.1} parent=1 // pred_check
      _
    $region15: #{_lambda_.1} parent=1 // pred_check_branch
      %39 = sbr.rel (0) target = $region17
    $region16: #{_lambda_.1} parent=1 // pred_region
      %41 = dma.done [#allocation6], 1024
    $region17: #{_lambda_.1} parent=1 // pred_fallthru
      _
    %v42 = vld [vmem:[#allocation2] sm:$0x1]
    %v43 = vld [vmem:[#allocation5] sm:$0xff]
    %v44 = vld [vmem:[#allocation5 + $0x8] sm:$0xff]
    %v45 = vld [vmem:[#allocation5 + $0x10] sm:$0xff]
    %v46 = vld [vmem:[#allocation5 + $0x18] sm:$0xff]
    %v47 = vld [vmem:[#allocation5 + $0x20] sm:$0xff]
    %v48 = vld [vmem:[#allocation5 + $0x28] sm:$0xff]
    %v49 = vld [vmem:[#allocation5 + $0x30] sm:$0xff]
    %v50 = vld [vmem:[#allocation5 + $0x38] sm:$0xff]
    %vm51 = vcmask 523264
    %v53 = vsel %vm51, %v42, 0
    %55 = vmatpush.msra.mxu0 0.0
    %56 = vmatpush.msra.mxu0 0.0
    %57 = vmatpush.msra.mxu0 0.0
    %58 = vmatpush.msra.mxu0 0.0
    %59 = vmatpush.msra.mxu0 0.0
    %60 = vmatpush.msra.mxu0 0.0
    %61 = vmatpush.msra.mxu0 0.0
    %62 = vmatpush.msra.mxu0 0.0
    %v63 = vand.u32 %v50, 4294901760
    %64 = vmatpush.msra.mxu0 %v63
    %v65 = vand.u32 %v49, 4294901760
    %66 = vmatpush.msra.mxu0 %v65
    %v67 = vand.u32 %v48, 4294901760
    %68 = vmatpush.msra.mxu0 %v67
    %v69 = vand.u32 %v47, 4294901760
    %70 = vmatpush.msra.mxu0 %v69
    %v71 = vand.u32 %v46, 4294901760
    %72 = vmatpush.msra.mxu0 %v71
    %v73 = vand.u32 %v45, 4294901760
    %74 = vmatpush.msra.mxu0 %v73
    %v75 = vand.u32 %v44, 4294901760
    %76 = vmatpush.msra.mxu0 %v75
    %v77 = vand.u32 %v43, 4294901760
    %78 = vmatpush.msra.mxu0 %v77
    %v79 = vand.u32 %v53, 4294901760
    %v80 = vsub.f32 %v53, %v79
    %v81 = vand.u32 %v80, 4294901760
    %v82 = vsub.f32 %v80, %v81
    %v83 = vand.u32 %v82, 4294901760
    %84 = vmatmul.f32.gmra.mxu0 %v83
    %v85 = vpop.f32.mrf.mxu0
    %v86 = vadd.f32 0.0, %v85
    %87 = vdwg.mxu0
    %88 = vmatpush.msra.mxu0 0.0
    %89 = vmatpush.msra.mxu0 0.0
    %90 = vmatpush.msra.mxu0 0.0
    %91 = vmatpush.msra.mxu0 0.0
    %92 = vmatpush.msra.mxu0 0.0
    %93 = vmatpush.msra.mxu0 0.0
    %94 = vmatpush.msra.mxu0 0.0
    %95 = vmatpush.msra.mxu0 0.0
    %v96 = vand.u32 %v50, 4294901760
    %v97 = vsub.f32 %v50, %v96
    %v98 = vand.u32 %v97, 4294901760
    %v99 = vsub.f32 %v97, %v98
    %v100 = vand.u32 %v99, 4294901760
    %101 = vmatpush.msra.mxu0 %v100
    %v102 = vand.u32 %v49, 4294901760
    %v103 = vsub.f32 %v49, %v102
    %v104 = vand.u32 %v103, 4294901760
    %v105 = vsub.f32 %v103, %v104
    %v106 = vand.u32 %v105, 4294901760
    %107 = vmatpush.msra.mxu0 %v106
    %v108 = vand.u32 %v48, 4294901760
    %v109 = vsub.f32 %v48, %v108
    %v110 = vand.u32 %v109, 4294901760
    %v111 = vsub.f32 %v109, %v110
    %v112 = vand.u32 %v111, 4294901760
    %113 = vmatpush.msra.mxu0 %v112
    %v114 = vand.u32 %v47, 4294901760
    %v115 = vsub.f32 %v47, %v114
    %v116 = vand.u32 %v115, 4294901760
    %v117 = vsub.f32 %v115, %v116
    %v118 = vand.u32 %v117, 4294901760
    %119 = vmatpush.msra.mxu0 %v118
    %v120 = vand.u32 %v46, 4294901760
    %v121 = vsub.f32 %v46, %v120
    %v122 = vand.u32 %v121, 4294901760
    %v123 = vsub.f32 %v121, %v122
    %v124 = vand.u32 %v123, 4294901760
    %125 = vmatpush.msra.mxu0 %v124
    %v126 = vand.u32 %v45, 4294901760
    %v127 = vsub.f32 %v45, %v126
    %v128 = vand.u32 %v127, 4294901760
    %v129 = vsub.f32 %v127, %v128
    %v130 = vand.u32 %v129, 4294901760
    %131 = vmatpush.msra.mxu0 %v130
    %v132 = vand.u32 %v44, 4294901760
    %v133 = vsub.f32 %v44, %v132
    %v134 = vand.u32 %v133, 4294901760
    %v135 = vsub.f32 %v133, %v134
    %v136 = vand.u32 %v135, 4294901760
    %137 = vmatpush.msra.mxu0 %v136
    %v138 = vand.u32 %v43, 4294901760
    %v139 = vsub.f32 %v43, %v138
    %v140 = vand.u32 %v139, 4294901760
    %v141 = vsub.f32 %v139, %v140
    %v142 = vand.u32 %v141, 4294901760
    %143 = vmatpush.msra.mxu0 %v142
    %v144 = vand.u32 %v53, 4294901760
    %145 = vmatmul.f32.gmra.mxu0 %v144
    %v146 = vpop.f32.mrf.mxu0
    %v147 = vadd.f32 %v86, %v146
    %148 = vdwg.mxu0
    %149 = vmatpush.msra.mxu0 0.0
    %150 = vmatpush.msra.mxu0 0.0
    %151 = vmatpush.msra.mxu0 0.0
    %152 = vmatpush.msra.mxu0 0.0
    %153 = vmatpush.msra.mxu0 0.0
    %154 = vmatpush.msra.mxu0 0.0
    %155 = vmatpush.msra.mxu0 0.0
    %156 = vmatpush.msra.mxu0 0.0
    %v157 = vand.u32 %v50, 4294901760
    %v158 = vsub.f32 %v50, %v157
    %159 = vmatpush.msra.mxu0 %v158
    %v160 = vand.u32 %v49, 4294901760
    %v161 = vsub.f32 %v49, %v160
    %162 = vmatpush.msra.mxu0 %v161
    %v163 = vand.u32 %v48, 4294901760
    %v164 = vsub.f32 %v48, %v163
    %165 = vmatpush.msra.mxu0 %v164
    %v166 = vand.u32 %v47, 4294901760
    %v167 = vsub.f32 %v47, %v166
    %168 = vmatpush.msra.mxu0 %v167
    %v169 = vand.u32 %v46, 4294901760
    %v170 = vsub.f32 %v46, %v169
    %171 = vmatpush.msra.mxu0 %v170
    %v172 = vand.u32 %v45, 4294901760
    %v173 = vsub.f32 %v45, %v172
    %174 = vmatpush.msra.mxu0 %v173
    %v175 = vand.u32 %v44, 4294901760
    %v176 = vsub.f32 %v44, %v175
    %177 = vmatpush.msra.mxu0 %v176
    %v178 = vand.u32 %v43, 4294901760
    %v179 = vsub.f32 %v43, %v178
    %180 = vmatpush.msra.mxu0 %v179
    %v181 = vand.u32 %v53, 4294901760
    %v182 = vsub.f32 %v53, %v181
    %183 = vmatmul.f32.gmra.mxu0 %v182
    %v184 = vpop.f32.mrf.mxu0
    %v185 = vadd.f32 %v147, %v184
    %186 = vdwg.mxu0
    %187 = vmatpush.msra.mxu0 0.0
    %188 = vmatpush.msra.mxu0 0.0
    %189 = vmatpush.msra.mxu0 0.0
    %190 = vmatpush.msra.mxu0 0.0
    %191 = vmatpush.msra.mxu0 0.0
    %192 = vmatpush.msra.mxu0 0.0
    %193 = vmatpush.msra.mxu0 0.0
    %194 = vmatpush.msra.mxu0 0.0
    %v195 = vand.u32 %v50, 4294901760
    %196 = vmatpush.msra.mxu0 %v195
    %v197 = vand.u32 %v49, 4294901760
    %198 = vmatpush.msra.mxu0 %v197
    %v199 = vand.u32 %v48, 4294901760
    %200 = vmatpush.msra.mxu0 %v199
    %v201 = vand.u32 %v47, 4294901760
    %202 = vmatpush.msra.mxu0 %v201
    %v203 = vand.u32 %v46, 4294901760
    %204 = vmatpush.msra.mxu0 %v203
    %v205 = vand.u32 %v45, 4294901760
    %206 = vmatpush.msra.mxu0 %v205
    %v207 = vand.u32 %v44, 4294901760
    %208 = vmatpush.msra.mxu0 %v207
    %v209 = vand.u32 %v43, 4294901760
    %210 = vmatpush.msra.mxu0 %v209
    %v211 = vand.u32 %v53, 4294901760
    %v212 = vsub.f32 %v53, %v211
    %v213 = vand.u32 %v212, 4294901760
    %214 = vmatmul.f32.gmra.mxu0 %v213
    %v215 = vpop.f32.mrf.mxu0
    %v216 = vadd.f32 %v185, %v215
    %217 = vdwg.mxu0
    %218 = vmatpush.msra.mxu0 0.0
    %219 = vmatpush.msra.mxu0 0.0
    %220 = vmatpush.msra.mxu0 0.0
    %221 = vmatpush.msra.mxu0 0.0
    %222 = vmatpush.msra.mxu0 0.0
    %223 = vmatpush.msra.mxu0 0.0
    %224 = vmatpush.msra.mxu0 0.0
    %225 = vmatpush.msra.mxu0 0.0
    %v226 = vand.u32 %v50, 4294901760
    %v227 = vsub.f32 %v50, %v226
    %v228 = vand.u32 %v227, 4294901760
    %229 = vmatpush.msra.mxu0 %v228
    %v230 = vand.u32 %v49, 4294901760
    %v231 = vsub.f32 %v49, %v230
    %v232 = vand.u32 %v231, 4294901760
    %233 = vmatpush.msra.mxu0 %v232
    %v234 = vand.u32 %v48, 4294901760
    %v235 = vsub.f32 %v48, %v234
    %v236 = vand.u32 %v235, 4294901760
    %237 = vmatpush.msra.mxu0 %v236
    %v238 = vand.u32 %v47, 4294901760
    %v239 = vsub.f32 %v47, %v238
    %v240 = vand.u32 %v239, 4294901760
    %241 = vmatpush.msra.mxu0 %v240
    %v242 = vand.u32 %v46, 4294901760
    %v243 = vsub.f32 %v46, %v242
    %v244 = vand.u32 %v243, 4294901760
    %245 = vmatpush.msra.mxu0 %v244
    %v246 = vand.u32 %v45, 4294901760
    %v247 = vsub.f32 %v45, %v246
    %v248 = vand.u32 %v247, 4294901760
    %249 = vmatpush.msra.mxu0 %v248
    %v250 = vand.u32 %v44, 4294901760
    %v251 = vsub.f32 %v44, %v250
    %v252 = vand.u32 %v251, 4294901760
    %253 = vmatpush.msra.mxu0 %v252
    %v254 = vand.u32 %v43, 4294901760
    %v255 = vsub.f32 %v43, %v254
    %v256 = vand.u32 %v255, 4294901760
    %257 = vmatpush.msra.mxu0 %v256
    %v258 = vand.u32 %v53, 4294901760
    %259 = vmatmul.f32.gmra.mxu0 %v258
    %v260 = vpop.f32.mrf.mxu0
    %v261 = vadd.f32 %v216, %v260
    %262 = vdwg.mxu0
    %263 = vmatpush.msra.mxu0 0.0
    %264 = vmatpush.msra.mxu0 0.0
    %265 = vmatpush.msra.mxu0 0.0
    %266 = vmatpush.msra.mxu0 0.0
    %267 = vmatpush.msra.mxu0 0.0
    %268 = vmatpush.msra.mxu0 0.0
    %269 = vmatpush.msra.mxu0 0.0
    %270 = vmatpush.msra.mxu0 0.0
    %v271 = vand.u32 %v50, 4294901760
    %272 = vmatpush.msra.mxu0 %v271
    %v273 = vand.u32 %v49, 4294901760
    %274 = vmatpush.msra.mxu0 %v273
    %v275 = vand.u32 %v48, 4294901760
    %276 = vmatpush.msra.mxu0 %v275
    %v277 = vand.u32 %v47, 4294901760
    %278 = vmatpush.msra.mxu0 %v277
    %v279 = vand.u32 %v46, 4294901760
    %280 = vmatpush.msra.mxu0 %v279
    %v281 = vand.u32 %v45, 4294901760
    %282 = vmatpush.msra.mxu0 %v281
    %v283 = vand.u32 %v44, 4294901760
    %284 = vmatpush.msra.mxu0 %v283
    %v285 = vand.u32 %v43, 4294901760
    %286 = vmatpush.msra.mxu0 %v285
    %v287 = vand.u32 %v53, 4294901760
    %288 = vmatmul.f32.gmra.mxu0 %v287
    %v289 = vpop.f32.mrf.mxu0
    %v290 = vadd.f32 %v261, %v289
    %291 = vdwg.mxu0
    %292 = vst [vmem:[#allocation7] sm:$0x1] %v290
    // Predicated region
    $region18: #{_lambda_.1} parent=1 // pred_check
      _
    $region19: #{_lambda_.1} parent=1 // pred_check_branch
      %294 = sbr.rel (0) target = $region21
    $region20: #{_lambda_.1} parent=1 // pred_region
      %296 = vsyncadd [#allocation4], 0
      %s298 = sshll.u32 [#allocation7], 4
      %s299 = int_to_ptr.vmem [resolvable:$true] %s298
      %s300 = sshll.u32 %s2, 4
      %s301 = int_to_ptr.hbm [resolvable:$true] %s300
      %303 = dma.vmem_to_hbm [thread:$0]  %s299, 16, %s301, [#allocation4]
    $region21: #{_lambda_.1} parent=1 // pred_fallthru
      _
    // Predicated region
    $region22: #{_lambda_.1} parent=1 // pred_check
      _
    $region23: #{_lambda_.1} parent=1 // pred_check_branch
      %305 = sbr.rel (0) target = $region25
    $region24: #{_lambda_.1} parent=1 // pred_region
      %307 = dma.done [#allocation4], 16
    $region25: #{_lambda_.1} parent=1 // pred_fallthru
      _
    %308 = vsyncpa [#allocation3], 1
    %309 = vsyncpa [#allocation6], 1
    %310 = vsyncpa [#allocation4], 1

</llo_original>
